<compile_context>
chip_gen: v6e
topology: v6e:2x2x1
jax: 0.10.0
libtpu: 0.0.40
codegen_flags: <defaults>
</compile_context>

<pallas_src>
import functools

import numpy as np
import jax
import jax.numpy as jnp
from jax.experimental import pallas as pl
from jax.experimental.pallas import tpu as pltpu

EPS = 1e-5          # PyTorch BatchNorm1d default eps
NEG_SLOPE = 0.01    # PyTorch LeakyReLU default negative_slope


def _residual_kernel(x_ref, vm_ref, mm1_ref, mp1_ref,
                     w1_ref, b1_ref, g1_ref, be1_ref,
                     w2_ref, b2_ref, g2_ref, be2_ref,
                     w3_ref, b3_ref, o_ref, *, nl, nlp):
    x = x_ref[...]                 # (Cp, NLp) f32: channels on sublanes, positions on lanes
    vm = vm_ref[...]               # (1, NLp): 1.0 on real (un-padded) positions
    mm1 = mm1_ref[...]             # (1, NLp): 1.0 where position i-1 exists within the sample
    mp1 = mp1_ref[...]             # (1, NLp): 1.0 where position i+1 exists within the sample
    inv_n = jnp.float32(1.0 / nl)

    def conv3(a, w_ref, b_ref):
        # k=3, stride=1, pad=1 conv as ONE MXU matmul: (Hp, 3C) @ (3C, NLp).
        # +/-1 shifts are lane rolls (XLU); per-sample zero padding via masks (VPU).
        a_m1 = pltpu.roll(a, shift=1, axis=1) * mm1          # a[:, i-1]
        a_p1 = pltpu.roll(a, shift=nlp - 1, axis=1) * mp1    # a[:, i+1]
        a_cat = jnp.concatenate([a_m1, a, a_p1], axis=0).astype(jnp.bfloat16)
        y = jnp.dot(w_ref[...], a_cat, preferred_element_type=jnp.float32)
        return y + b_ref[...]

    def batchnorm(a, g_ref, be_ref):
        # Training-mode BatchNorm1d: biased stats over all real N*L positions per
        # channel, one pass (sum & sum-of-squares), padded lanes masked out.
        s1 = jnp.sum(a * vm, axis=1, keepdims=True)
        s2 = jnp.sum(a * a * vm, axis=1, keepdims=True)
        mean = s1 * inv_n
        var = s2 * inv_n - mean * mean
        scale = g_ref[...] * jax.lax.rsqrt(var + EPS)
        return a * scale + (be_ref[...] - mean * scale)

    def leaky_relu(a):
        return jnp.maximum(a, NEG_SLOPE * a)

    h = leaky_relu(batchnorm(conv3(x, w1_ref, b1_ref), g1_ref, be1_ref))   # conv1 block
    y = batchnorm(conv3(h, w2_ref, b2_ref), g2_ref, be2_ref)               # conv2 block
    skip = jnp.dot(w3_ref[...], x.astype(jnp.bfloat16),
                   preferred_element_type=jnp.float32) + b3_ref[...]       # conv3 (1x1)
    o_ref[...] = leaky_relu(skip + y)


def _round_up(v, m):
    return ((v + m - 1) // m) * m


def residual_forward(x_ncl, params):
    """x_ncl: (N, C_in, L) -> (N, hidden, L), PyTorch-equivalent forward."""
    n, c_in, l = x_ncl.shape
    hidden = params["w1"].shape[0]
    nl = n * l
    nlp = max(128, _round_up(nl, 128))   # lane-dense position axis
    cp = _round_up(c_in, 8)              # sublane-aligned channel axes
    hp = _round_up(hidden, 8)

    # Input: (N, C, L) -> (C, N*L), zero-padded to (Cp, NLp).
    x_cnl = jnp.transpose(x_ncl, (1, 0, 2)).reshape(c_in, nl).astype(jnp.float32)
    x_pad = jnp.zeros((cp, nlp), jnp.float32).at[:c_in, :nl].set(x_cnl)

    # Tiny (1, NLp) masks: validity (for BN stats) and conv boundary masks.
    pos = np.arange(nlp)
    valid = pos < nl
    vmask = valid.astype(np.float32)[None, :]
    mm1 = (valid & (pos % l != 0)).astype(np.float32)[None, :]
    mp1 = (valid & (pos % l != l - 1)).astype(np.float32)[None, :]

    # PyTorch Conv1d weights (out, in, k) -> fused (Hp, 3*Cin_pad) bf16 matching
    # the concat order [a[i-1], a[i], a[i+1]] along the contraction axis.
    def conv_w_cat(w, cin_pad, cout_pad):
        out_c, in_c, k = w.shape
        wp = jnp.zeros((cout_pad, k, cin_pad), jnp.float32)
        wp = wp.at[:out_c, :, :in_c].set(jnp.transpose(w, (0, 2, 1)).astype(jnp.float32))
        return wp.reshape(cout_pad, k * cin_pad).astype(jnp.bfloat16)

    def col(v, cpad, fill=0.0):
        out = jnp.full((cpad, 1), fill, jnp.float32)
        return out.at[:v.shape[0], 0].set(v.astype(jnp.float32))

    w1c = conv_w_cat(params["w1"], cp, hp)                      # (Hp, 3*Cp)
    w2c = conv_w_cat(params["w2"], hp, hp)                      # (Hp, 3*Hp)
    w3p = jnp.zeros((hp, cp), jnp.float32).at[:hidden, :c_in].set(
        params["w3"][:, :, 0].astype(jnp.float32)).astype(jnp.bfloat16)

    kernel = functools.partial(_residual_kernel, nl=nl, nlp=nlp)
    vmem = pl.BlockSpec(memory_space=pltpu.MemorySpace.VMEM)

    out = pl.pallas_call(
        kernel,
        out_shape=jax.ShapeDtypeStruct((hp, nlp), jnp.float32),
        in_specs=[vmem] * 14,
        out_specs=vmem,
    )(x_pad, jnp.asarray(vmask), jnp.asarray(mm1), jnp.asarray(mp1),
      w1c, col(params["b1"], hp), col(params["g1"], hp, 1.0), col(params["be1"], hp),
      w2c, col(params["b2"], hp), col(params["g2"], hp, 1.0), col(params["be2"], hp),
      w3p, col(params["b3"], hp))

    out = out[:hidden, :nl]                                     # (H, N*L)
    return jnp.transpose(out.reshape(hidden, n, l), (1, 0, 2))  # (N, H, L)


def residual_reference(x_ncl, params):
    """Pure-JAX (XLA, full f32) reference of the PyTorch forward."""
    prec = jax.lax.Precision.HIGHEST

    def conv1d(x, w, b, pad):
        y = jax.lax.conv_general_dilated(
            x, w, window_strides=(1,), padding=[(pad, pad)],
            dimension_numbers=("NCH", "OIH", "NCH"), precision=prec)
        return y + b[None, :, None]

    def bn(x, g, be):
        mean = jnp.mean(x, axis=(0, 2), keepdims=True)
        var = jnp.mean((x - mean) ** 2, axis=(0, 2), keepdims=True)
        return (x - mean) / jnp.sqrt(var + EPS) * g[None, :, None] + be[None, :, None]

    lrelu = lambda a: jnp.where(a >= 0, a, NEG_SLOPE * a)
    y = lrelu(bn(conv1d(x_ncl, params["w1"], params["b1"], 1), params["g1"], params["be1"]))
    y = bn(conv1d(y, params["w2"], params["b2"], 1), params["g2"], params["be2"])
    skip = conv1d(x_ncl, params["w3"], params["b3"], 0)
    return lrelu(skip + y)


if __name__ == "__main__":
    key = jax.random.PRNGKey(0)
    n, c_in, hidden, seq_len = 2, 4, 8, 16   # input_dim=4, hidden_dim=8
    keys = jax.random.split(key, 11)

    params = {
        "w1": 0.2 * jax.random.normal(keys[0], (hidden, c_in, 3), jnp.float32),
        "b1": 0.1 * jax.random.normal(keys[1], (hidden,), jnp.float32),
        "g1": 1.0 + 0.1 * jax.random.normal(keys[2], (hidden,), jnp.float32),
        "be1": 0.1 * jax.random.normal(keys[3], (hidden,), jnp.float32),
        "w2": 0.2 * jax.random.normal(keys[4], (hidden, hidden, 3), jnp.float32),
        "b2": 0.1 * jax.random.normal(keys[5], (hidden,), jnp.float32),
        "g2": 1.0 + 0.1 * jax.random.normal(keys[6], (hidden,), jnp.float32),
        "be2": 0.1 * jax.random.normal(keys[7], (hidden,), jnp.float32),
        "w3": 0.2 * jax.random.normal(keys[8], (hidden, c_in, 1), jnp.float32),
        "b3": 0.1 * jax.random.normal(keys[9], (hidden,), jnp.float32),
    }
    x = jax.random.normal(keys[10], (n, c_in, seq_len), jnp.float32)

    out = jax.block_until_ready(residual_forward(x, params))
    ref = jax.block_until_ready(residual_reference(x, params))

    assert out.shape == (n, hidden, seq_len), out.shape
    # Kernel uses bf16 MXU operands with f32 accumulation; reference is full f32
    # (HIGHEST), so allow bf16-class matmul error through the 2-conv/2-BN chain.
    max_err = float(jnp.max(jnp.abs(out - ref)))
    if not jnp.allclose(out, ref, atol=3e-2, rtol=3e-2):
        raise AssertionError(f"kernel/reference mismatch, max abs err = {max_err}")
    print("KERNEL_OK")
</pallas_src>

<mosaic_0001>
module attributes {stable_mosaic.version = 11 : i64} {
  func.func @_residual_kernel(%arg0: memref<8x128xf32, #tpu.memory_space<vmem>>, %arg1: memref<1x128xf32, #tpu.memory_space<vmem>>, %arg2: memref<1x128xf32, #tpu.memory_space<vmem>>, %arg3: memref<1x128xf32, #tpu.memory_space<vmem>>, %arg4: memref<8x24xbf16, #tpu.memory_space<vmem>>, %arg5: memref<8x1xf32, #tpu.memory_space<vmem>>, %arg6: memref<8x1xf32, #tpu.memory_space<vmem>>, %arg7: memref<8x1xf32, #tpu.memory_space<vmem>>, %arg8: memref<8x24xbf16, #tpu.memory_space<vmem>>, %arg9: memref<8x1xf32, #tpu.memory_space<vmem>>, %arg10: memref<8x1xf32, #tpu.memory_space<vmem>>, %arg11: memref<8x1xf32, #tpu.memory_space<vmem>>, %arg12: memref<8x8xbf16, #tpu.memory_space<vmem>>, %arg13: memref<8x1xf32, #tpu.memory_space<vmem>>, %arg14: memref<8x128xf32, #tpu.memory_space<vmem>>) attributes {dimension_semantics = [], scalar_prefetch = 0 : i64, scratch_operands = 0 : i64, tpu.core_type = #tpu.core_type<tc>} {
    %c0 = arith.constant 0 : index
    %c0_0 = arith.constant 0 : index
    %0 = vector.load %arg0[%c0, %c0_0] : memref<8x128xf32, #tpu.memory_space<vmem>>, vector<8x128xf32>
    %c0_1 = arith.constant 0 : index
    %c0_2 = arith.constant 0 : index
    %1 = vector.load %arg1[%c0_1, %c0_2] : memref<1x128xf32, #tpu.memory_space<vmem>>, vector<1x128xf32>
    %c0_3 = arith.constant 0 : index
    %c0_4 = arith.constant 0 : index
    %2 = vector.load %arg2[%c0_3, %c0_4] : memref<1x128xf32, #tpu.memory_space<vmem>>, vector<1x128xf32>
    %c0_5 = arith.constant 0 : index
    %c0_6 = arith.constant 0 : index
    %3 = vector.load %arg3[%c0_5, %c0_6] : memref<1x128xf32, #tpu.memory_space<vmem>>, vector<1x128xf32>
    %c1_i32 = arith.constant 1 : i32
    %4 = tpu.dynamic_rotate %0 by %c1_i32 dim 1 : vector<8x128xf32>, i32 -> vector<8x128xf32>
    %5 = vector.broadcast %2 : vector<1x128xf32> to vector<8x128xf32>
    %6 = arith.mulf %4, %5 : vector<8x128xf32>
    %c127_i32 = arith.constant 127 : i32
    %7 = tpu.dynamic_rotate %0 by %c127_i32 dim 1 : vector<8x128xf32>, i32 -> vector<8x128xf32>
    %8 = vector.broadcast %3 : vector<1x128xf32> to vector<8x128xf32>
    %9 = arith.mulf %7, %8 : vector<8x128xf32>
    %10 = tpu.concatenate %6, %0, %9 in 0 : vector<8x128xf32>, vector<8x128xf32>, vector<8x128xf32> -> vector<24x128xf32>
    %11 = arith.truncf %10 : vector<24x128xf32> to vector<24x128xbf16>
    %c0_7 = arith.constant 0 : index
    %c0_8 = arith.constant 0 : index
    %12 = vector.load %arg4[%c0_7, %c0_8] : memref<8x24xbf16, #tpu.memory_space<vmem>>, vector<8x24xbf16>
    %cst = arith.constant dense<0.000000e+00> : vector<8x128xf32>
    %13 = tpu.matmul %12, %11, %cst {dimension_numbers = #tpu.dot_dimension_numbers<[1], [0], [0], [1], [0, 0, 1, 1], [], []>} : vector<8x24xbf16>, vector<24x128xbf16>, vector<8x128xf32> -> vector<8x128xf32>
    %c0_9 = arith.constant 0 : index
    %c0_10 = arith.constant 0 : index
    %14 = vector.load %arg5[%c0_9, %c0_10] : memref<8x1xf32, #tpu.memory_space<vmem>>, vector<8x1xf32>
    %15 = vector.broadcast %14 : vector<8x1xf32> to vector<8x128xf32>
    %16 = arith.addf %13, %15 : vector<8x128xf32>
    %17 = vector.broadcast %1 : vector<1x128xf32> to vector<8x128xf32>
    %18 = arith.mulf %16, %17 : vector<8x128xf32>
    %cst_11 = arith.constant dense<0.000000e+00> : vector<8xf32>
    %19 = vector.multi_reduction <add>, %18, %cst_11 [1] : vector<8x128xf32> to vector<8xf32>
    %20 = vector.shape_cast %19 : vector<8xf32> to vector<8x1xf32>
    %21 = arith.mulf %16, %16 : vector<8x128xf32>
    %22 = vector.broadcast %1 : vector<1x128xf32> to vector<8x128xf32>
    %23 = arith.mulf %21, %22 : vector<8x128xf32>
    %cst_12 = arith.constant dense<0.000000e+00> : vector<8xf32>
    %24 = vector.multi_reduction <add>, %23, %cst_12 [1] : vector<8x128xf32> to vector<8xf32>
    %25 = vector.shape_cast %24 : vector<8xf32> to vector<8x1xf32>
    %cst_13 = arith.constant 3.125000e-02 : f32
    %26 = vector.broadcast %cst_13 : f32 to vector<8x1xf32>
    %27 = arith.mulf %20, %26 : vector<8x1xf32>
    %cst_14 = arith.constant 3.125000e-02 : f32
    %28 = vector.broadcast %cst_14 : f32 to vector<8x1xf32>
    %29 = arith.mulf %25, %28 : vector<8x1xf32>
    %30 = arith.mulf %27, %27 : vector<8x1xf32>
    %31 = arith.subf %29, %30 : vector<8x1xf32>
    %c0_15 = arith.constant 0 : index
    %c0_16 = arith.constant 0 : index
    %32 = vector.load %arg6[%c0_15, %c0_16] : memref<8x1xf32, #tpu.memory_space<vmem>>, vector<8x1xf32>
    %cst_17 = arith.constant 9.99999974E-6 : f32
    %33 = vector.broadcast %cst_17 : f32 to vector<8x1xf32>
    %34 = arith.addf %31, %33 : vector<8x1xf32>
    %35 = math.rsqrt %34 : vector<8x1xf32>
    %36 = arith.mulf %32, %35 : vector<8x1xf32>
    %37 = vector.broadcast %36 : vector<8x1xf32> to vector<8x128xf32>
    %38 = arith.mulf %16, %37 : vector<8x128xf32>
    %c0_18 = arith.constant 0 : index
    %c0_19 = arith.constant 0 : index
    %39 = vector.load %arg7[%c0_18, %c0_19] : memref<8x1xf32, #tpu.memory_space<vmem>>, vector<8x1xf32>
    %40 = arith.mulf %27, %36 : vector<8x1xf32>
    %41 = arith.subf %39, %40 : vector<8x1xf32>
    %42 = vector.broadcast %41 : vector<8x1xf32> to vector<8x128xf32>
    %43 = arith.addf %38, %42 : vector<8x128xf32>
    %cst_20 = arith.constant 0.00999999977 : f32
    %44 = vector.broadcast %cst_20 : f32 to vector<8x128xf32>
    %45 = arith.mulf %44, %43 : vector<8x128xf32>
    %46 = arith.maximumf %43, %45 : vector<8x128xf32>
    %c1_i32_21 = arith.constant 1 : i32
    %47 = tpu.dynamic_rotate %46 by %c1_i32_21 dim 1 : vector<8x128xf32>, i32 -> vector<8x128xf32>
    %48 = vector.broadcast %2 : vector<1x128xf32> to vector<8x128xf32>
    %49 = arith.mulf %47, %48 : vector<8x128xf32>
    %c127_i32_22 = arith.constant 127 : i32
    %50 = tpu.dynamic_rotate %46 by %c127_i32_22 dim 1 : vector<8x128xf32>, i32 -> vector<8x128xf32>
    %51 = vector.broadcast %3 : vector<1x128xf32> to vector<8x128xf32>
    %52 = arith.mulf %50, %51 : vector<8x128xf32>
    %53 = tpu.concatenate %49, %46, %52 in 0 : vector<8x128xf32>, vector<8x128xf32>, vector<8x128xf32> -> vector<24x128xf32>
    %54 = arith.truncf %53 : vector<24x128xf32> to vector<24x128xbf16>
    %c0_23 = arith.constant 0 : index
    %c0_24 = arith.constant 0 : index
    %55 = vector.load %arg8[%c0_23, %c0_24] : memref<8x24xbf16, #tpu.memory_space<vmem>>, vector<8x24xbf16>
    %cst_25 = arith.constant dense<0.000000e+00> : vector<8x128xf32>
    %56 = tpu.matmul %55, %54, %cst_25 {dimension_numbers = #tpu.dot_dimension_numbers<[1], [0], [0], [1], [0, 0, 1, 1], [], []>} : vector<8x24xbf16>, vector<24x128xbf16>, vector<8x128xf32> -> vector<8x128xf32>
    %c0_26 = arith.constant 0 : index
    %c0_27 = arith.constant 0 : index
    %57 = vector.load %arg9[%c0_26, %c0_27] : memref<8x1xf32, #tpu.memory_space<vmem>>, vector<8x1xf32>
    %58 = vector.broadcast %57 : vector<8x1xf32> to vector<8x128xf32>
    %59 = arith.addf %56, %58 : vector<8x128xf32>
    %60 = vector.broadcast %1 : vector<1x128xf32> to vector<8x128xf32>
    %61 = arith.mulf %59, %60 : vector<8x128xf32>
    %cst_28 = arith.constant dense<0.000000e+00> : vector<8xf32>
    %62 = vector.multi_reduction <add>, %61, %cst_28 [1] : vector<8x128xf32> to vector<8xf32>
    %63 = vector.shape_cast %62 : vector<8xf32> to vector<8x1xf32>
    %64 = arith.mulf %59, %59 : vector<8x128xf32>
    %65 = vector.broadcast %1 : vector<1x128xf32> to vector<8x128xf32>
    %66 = arith.mulf %64, %65 : vector<8x128xf32>
    %cst_29 = arith.constant dense<0.000000e+00> : vector<8xf32>
    %67 = vector.multi_reduction <add>, %66, %cst_29 [1] : vector<8x128xf32> to vector<8xf32>
    %68 = vector.shape_cast %67 : vector<8xf32> to vector<8x1xf32>
    %cst_30 = arith.constant 3.125000e-02 : f32
    %69 = vector.broadcast %cst_30 : f32 to vector<8x1xf32>
    %70 = arith.mulf %63, %69 : vector<8x1xf32>
    %cst_31 = arith.constant 3.125000e-02 : f32
    %71 = vector.broadcast %cst_31 : f32 to vector<8x1xf32>
    %72 = arith.mulf %68, %71 : vector<8x1xf32>
    %73 = arith.mulf %70, %70 : vector<8x1xf32>
    %74 = arith.subf %72, %73 : vector<8x1xf32>
    %c0_32 = arith.constant 0 : index
    %c0_33 = arith.constant 0 : index
    %75 = vector.load %arg10[%c0_32, %c0_33] : memref<8x1xf32, #tpu.memory_space<vmem>>, vector<8x1xf32>
    %cst_34 = arith.constant 9.99999974E-6 : f32
    %76 = vector.broadcast %cst_34 : f32 to vector<8x1xf32>
    %77 = arith.addf %74, %76 : vector<8x1xf32>
    %78 = math.rsqrt %77 : vector<8x1xf32>
    %79 = arith.mulf %75, %78 : vector<8x1xf32>
    %80 = vector.broadcast %79 : vector<8x1xf32> to vector<8x128xf32>
    %81 = arith.mulf %59, %80 : vector<8x128xf32>
    %c0_35 = arith.constant 0 : index
    %c0_36 = arith.constant 0 : index
    %82 = vector.load %arg11[%c0_35, %c0_36] : memref<8x1xf32, #tpu.memory_space<vmem>>, vector<8x1xf32>
    %83 = arith.mulf %70, %79 : vector<8x1xf32>
    %84 = arith.subf %82, %83 : vector<8x1xf32>
    %85 = vector.broadcast %84 : vector<8x1xf32> to vector<8x128xf32>
    %86 = arith.addf %81, %85 : vector<8x128xf32>
    %c0_37 = arith.constant 0 : index
    %c0_38 = arith.constant 0 : index
    %87 = vector.load %arg12[%c0_37, %c0_38] : memref<8x8xbf16, #tpu.memory_space<vmem>>, vector<8x8xbf16>
    %88 = arith.truncf %0 : vector<8x128xf32> to vector<8x128xbf16>
    %cst_39 = arith.constant dense<0.000000e+00> : vector<8x128xf32>
    %89 = tpu.matmul %87, %88, %cst_39 {dimension_numbers = #tpu.dot_dimension_numbers<[1], [0], [0], [1], [0, 0, 1, 1], [], []>} : vector<8x8xbf16>, vector<8x128xbf16>, vector<8x128xf32> -> vector<8x128xf32>
    %c0_40 = arith.constant 0 : index
    %c0_41 = arith.constant 0 : index
    %90 = vector.load %arg13[%c0_40, %c0_41] : memref<8x1xf32, #tpu.memory_space<vmem>>, vector<8x1xf32>
    %91 = vector.broadcast %90 : vector<8x1xf32> to vector<8x128xf32>
    %92 = arith.addf %89, %91 : vector<8x128xf32>
    %93 = arith.addf %92, %86 : vector<8x128xf32>
    %cst_42 = arith.constant 0.00999999977 : f32
    %94 = vector.broadcast %cst_42 : f32 to vector<8x128xf32>
    %95 = arith.mulf %94, %93 : vector<8x128xf32>
    %96 = arith.maximumf %93, %95 : vector<8x128xf32>
    %c0_43 = arith.constant 0 : index
    %c0_44 = arith.constant 0 : index
    %97 = vector.load %arg14[%c0_43, %c0_44] : memref<8x128xf32, #tpu.memory_space<vmem>>, vector<8x128xf32>
    tpu.vector_store %arg14[%c0_43, %c0_44], %96 {strides = array<i32>} : memref<8x128xf32, #tpu.memory_space<vmem>>, vector<8x128xf32>,
    return
  }
}

</mosaic_0001>

<llo_original>
// kernel: tpu_custom_call.1
$region0: #{tpu_custom_call.1}
  #allocation0 [shape = 'u32[]', space=smem, size = 0x4, offset = 0x4, fixed_abs, tag = 'smem constant byte address 0x4 - core index']
  #allocation1 [shape = 'u32[144,128]{1,0:T(1,128)}', space=vmem, size = 0x12000, scoped, tag = 'internal scratch']
  %s0 = inlined_call_operand.vmem [shape: f32[8,128], index: 0, kind: input, shape index: {}]
  %s1 = inlined_call_operand.vmem [shape: f32[1,128], index: 1, kind: input, shape index: {}]
  %s2 = inlined_call_operand.vmem [shape: f32[1,128], index: 2, kind: input, shape index: {}]
  %s3 = inlined_call_operand.vmem [shape: f32[1,128], index: 3, kind: input, shape index: {}]
  %s4 = inlined_call_operand.vmem [shape: bf16[8,24], index: 4, kind: input, shape index: {}]
  %s5 = inlined_call_operand.vmem [shape: f32[8,1], index: 5, kind: input, shape index: {}]
  %s6 = inlined_call_operand.vmem [shape: f32[8,1], index: 6, kind: input, shape index: {}]
  %s7 = inlined_call_operand.vmem [shape: f32[8,1], index: 7, kind: input, shape index: {}]
  %s8 = inlined_call_operand.vmem [shape: bf16[8,24], index: 8, kind: input, shape index: {}]
  %s9 = inlined_call_operand.vmem [shape: f32[8,1], index: 9, kind: input, shape index: {}]
  %s10 = inlined_call_operand.vmem [shape: f32[8,1], index: 10, kind: input, shape index: {}]
  %s11 = inlined_call_operand.vmem [shape: f32[8,1], index: 11, kind: input, shape index: {}]
  %s12 = inlined_call_operand.vmem [shape: bf16[8,8], index: 12, kind: input, shape index: {}]
  %s13 = inlined_call_operand.vmem [shape: f32[8,1], index: 13, kind: input, shape index: {}]
  %s14 = inlined_call_operand.hbm [shape: f32[8,128], index: 14, kind: output, shape index: {}]
  %s15 = sld [smem:[#allocation0]]
  $region66: #{tpu_custom_call.1} parent=0
    _
  %s17 = ssub.s32 1, %s15
  %s18 = scalar_select 0, %s17, %s15
  $region1: #{tpu_custom_call.1} parent=0
    #allocation2 [shape = 'u8[4096]{0}', space=vmem, size = 0x1000, scoped, tag = 'output window, operand 0, single buffered']
    #allocation3 [shape = 's32[1]{0}', space=sflag, size = 0x4, scoped, tag = 'scoped memory for tpu_custom_call.1']
    %19 = vsyncpa [#allocation3], 0
    // Predicated region
    $region2: #{tpu_custom_call.1} parent=1 // pred_check
      _
    $region3: #{tpu_custom_call.1} parent=1 // pred_check_branch
      %21 = sbr.rel (0) target = $region5
    $region4: #{tpu_custom_call.1} parent=1 // pred_region
      _
    $region5: #{tpu_custom_call.1} parent=1 // pred_fallthru
      _
    // Predicated region
    $region6: #{tpu_custom_call.1} parent=1 // pred_check
      _
    $region7: #{tpu_custom_call.1} parent=1 // pred_check_branch
      %23 = sbr.rel (0) target = $region9
    $region8: #{tpu_custom_call.1} parent=1 // pred_region
      _
    $region9: #{tpu_custom_call.1} parent=1 // pred_fallthru
      _
    // Predicated region
    $region10: #{tpu_custom_call.1} parent=1 // pred_check
      _
    $region11: #{tpu_custom_call.1} parent=1 // pred_check_branch
      %25 = sbr.rel (0) target = $region13
    $region12: #{tpu_custom_call.1} parent=1 // pred_region
      _
    $region13: #{tpu_custom_call.1} parent=1 // pred_fallthru
      _
    // Predicated region
    $region14: #{tpu_custom_call.1} parent=1 // pred_check
      _
    $region15: #{tpu_custom_call.1} parent=1 // pred_check_branch
      %27 = sbr.rel (0) target = $region17
    $region16: #{tpu_custom_call.1} parent=1 // pred_region
      _
    $region17: #{tpu_custom_call.1} parent=1 // pred_fallthru
      _
    // Predicated region
    $region18: #{tpu_custom_call.1} parent=1 // pred_check
      _
    $region19: #{tpu_custom_call.1} parent=1 // pred_check_branch
      %29 = sbr.rel (0) target = $region21
    $region20: #{tpu_custom_call.1} parent=1 // pred_region
      _
    $region21: #{tpu_custom_call.1} parent=1 // pred_fallthru
      _
    // Predicated region
    $region22: #{tpu_custom_call.1} parent=1 // pred_check
      _
    $region23: #{tpu_custom_call.1} parent=1 // pred_check_branch
      %31 = sbr.rel (0) target = $region25
    $region24: #{tpu_custom_call.1} parent=1 // pred_region
      _
    $region25: #{tpu_custom_call.1} parent=1 // pred_fallthru
      _
    // Predicated region
    $region26: #{tpu_custom_call.1} parent=1 // pred_check
      _
    $region27: #{tpu_custom_call.1} parent=1 // pred_check_branch
      %33 = sbr.rel (0) target = $region29
    $region28: #{tpu_custom_call.1} parent=1 // pred_region
      _
    $region29: #{tpu_custom_call.1} parent=1 // pred_fallthru
      _
    // Predicated region
    $region30: #{tpu_custom_call.1} parent=1 // pred_check
      _
    $region31: #{tpu_custom_call.1} parent=1 // pred_check_branch
      %35 = sbr.rel (0) target = $region33
    $region32: #{tpu_custom_call.1} parent=1 // pred_region
      _
    $region33: #{tpu_custom_call.1} parent=1 // pred_fallthru
      _
    // Predicated region
    $region34: #{tpu_custom_call.1} parent=1 // pred_check
      _
    $region35: #{tpu_custom_call.1} parent=1 // pred_check_branch
      %37 = sbr.rel (0) target = $region37
    $region36: #{tpu_custom_call.1} parent=1 // pred_region
      _
    $region37: #{tpu_custom_call.1} parent=1 // pred_fallthru
      _
    // Predicated region
    $region38: #{tpu_custom_call.1} parent=1 // pred_check
      _
    $region39: #{tpu_custom_call.1} parent=1 // pred_check_branch
      %39 = sbr.rel (0) target = $region41
    $region40: #{tpu_custom_call.1} parent=1 // pred_region
      _
    $region41: #{tpu_custom_call.1} parent=1 // pred_fallthru
      _
    // Predicated region
    $region42: #{tpu_custom_call.1} parent=1 // pred_check
      _
    $region43: #{tpu_custom_call.1} parent=1 // pred_check_branch
      %41 = sbr.rel (0) target = $region45
    $region44: #{tpu_custom_call.1} parent=1 // pred_region
      _
    $region45: #{tpu_custom_call.1} parent=1 // pred_fallthru
      _
    // Predicated region
    $region46: #{tpu_custom_call.1} parent=1 // pred_check
      _
    $region47: #{tpu_custom_call.1} parent=1 // pred_check_branch
      %43 = sbr.rel (0) target = $region49
    $region48: #{tpu_custom_call.1} parent=1 // pred_region
      _
    $region49: #{tpu_custom_call.1} parent=1 // pred_fallthru
      _
    // Predicated region
    $region50: #{tpu_custom_call.1} parent=1 // pred_check
      _
    $region51: #{tpu_custom_call.1} parent=1 // pred_check_branch
      %45 = sbr.rel (0) target = $region53
    $region52: #{tpu_custom_call.1} parent=1 // pred_region
      _
    $region53: #{tpu_custom_call.1} parent=1 // pred_fallthru
      _
    // Predicated region
    $region54: #{tpu_custom_call.1} parent=1 // pred_check
      _
    $region55: #{tpu_custom_call.1} parent=1 // pred_check_branch
      %47 = sbr.rel (0) target = $region57
    $region56: #{tpu_custom_call.1} parent=1 // pred_region
      _
    $region57: #{tpu_custom_call.1} parent=1 // pred_fallthru
      _
    %v49 = vld [vmem:[%s0] sm:$0xff]
    %v50 = vld [vmem:[%s1] sm:$0x1]
    %v51 = vld [vmem:[%s2] sm:$0x1]
    %v52 = vld [vmem:[%s3] sm:$0x1]
    %53 = vrot.lane.b32.xlu0 %v49, 1
    %v54 = vpop.permute.xlu0 %53
    %v56 = vlaneseq
    %v57 = vshrl.u32 %v56, 7
    %v58 = vsub.s32 0, %v57
    %v59 = vrot.slane %v51, %v58
    %v61 = vmul.f32 %v54, %v59
    %62 = vrot.lane.b32.xlu0 %v49, 127
    %v63 = vpop.permute.xlu0 %62
    %v65 = vlaneseq
    %v66 = vshrl.u32 %v65, 7
    %v67 = vsub.s32 0, %v66
    %v68 = vrot.slane %v52, %v67
    %v70 = vmul.f32 %v63, %v68
    %v71 = vpack.c.bf16 %v49, %v61
    %v72 = vpack.c.bf16 %v70, %v70
    %v73 = vld [vmem:[%s4] sm:$0xf]
    %v74 = vld [vmem:[%s5] sm:$0xff]
    %76 = vset.pattern.permute.xlu0 0
    %77 = vperm.xlu0 %76, %v74
    %v78 = vpop.permute.xlu0 %77
    %vm80 = vcmask 195584
    %v82 = vsel %vm80, %v73, 0
    %vm84 = vcmask 1043456
    %v86 = vsel %vm84, %v72, 0
    %88 = vmatprep.subr.bf16.mxu0 0
    %89 = vmatpush1.bf16.msra.mxu0 0
    %90 = vmatprep.subr.bf16.mxu0 0
    %91 = vmatpush1.bf16.msra.mxu0 0
    %92 = vmatprep.subr.bf16.mxu0 0
    %93 = vmatpush1.bf16.msra.mxu0 0
    %94 = vmatprep.subr.bf16.mxu0 0
    %95 = vmatpush1.bf16.msra.mxu0 0
    %96 = vmatprep.subr.bf16.mxu0 0
    %97 = vmatpush1.bf16.msra.mxu0 0
    %98 = vmatprep.subr.bf16.mxu0 0
    %99 = vmatpush1.bf16.msra.mxu0 0
    %100 = vmatprep.subr.bf16.mxu0 0
    %101 = vmatpush1.bf16.msra.mxu0 %v86
    %102 = vmatprep.subr.bf16.mxu0 0
    %103 = vmatpush1.bf16.msra.mxu0 %v71
    %104 = vmatprep.subr.bf16.mxu0 0
    %105 = vmatpush2.bf16.msra.mxu0 0
    %106 = vmatprep.subr.bf16.mxu0 0
    %107 = vmatpush2.bf16.msra.mxu0 0
    %108 = vmatprep.subr.bf16.mxu0 0
    %109 = vmatpush2.bf16.msra.mxu0 0
    %110 = vmatprep.subr.bf16.mxu0 0
    %111 = vmatpush2.bf16.msra.mxu0 0
    %112 = vmatprep.subr.bf16.mxu0 0
    %113 = vmatpush2.bf16.msra.mxu0 0
    %114 = vmatprep.subr.bf16.mxu0 0
    %115 = vmatpush2.bf16.msra.mxu0 0
    %116 = vmatprep.subr.bf16.mxu0 0
    %117 = vmatpush2.bf16.msra.mxu0 0
    %118 = vmatprep.subr.bf16.mxu0 0
    %119 = vmatpush2.bf16.msra.mxu0 0
    %120 = vmatprep.mubr.bf16.mxu0 0
    %121 = vmatmul.mubr.bf16.gmra.mxu0 %v82
    %v122 = vpop.f32.mrf.mxu0
    %v123 = vadd.f32 %v78, %v122
    %v124 = vpop.f32.mrf.mxu0
    %v125 = vpop.f32.mrf.mxu0
    %v126 = vpop.f32.mrf.mxu0
    %127 = vdwg.mxu0
    %v129 = vlaneseq
    %v130 = vshrl.u32 %v129, 7
    %v131 = vsub.s32 0, %v130
    %v132 = vrot.slane %v50, %v131
    %v134 = vmul.f32 %v123, %v132
    %135 = vadd.xlane.f32.xlu0 %v134
    %v136 = vpop.xlane.xlu0 %135
    %v137 = vmul.f32 %v123, %v123
    %v138 = vmul.f32 %v137, %v132
    %139 = vadd.xlane.f32.xlu0 %v138
    %v140 = vpop.xlane.xlu0 %139
    %v141 = vmul.f32 %v136, 0.03125
    %v142 = vmul.f32 %v140, 0.03125
    %v143 = vmul.f32 %v141, %v141
    %v144 = vsub.f32 %v142, %v143
    %v145 = vld [vmem:[%s6] sm:$0xff]
    %v146 = vadd.f32 %v144, 1e-05
    %v147 = vrsqrt.pop %v146
    %v148 = vmul.f32 %v145, %v147
    %150 = vset.pattern.permute.xlu0 0
    %151 = vperm.xlu0 %150, %v148
    %v152 = vpop.permute.xlu0 %151
    %v154 = vmul.f32 %v123, %v152
    %v155 = vld [vmem:[%s7] sm:$0xff]
    %v156 = vmul.f32 %v141, %v148
    %v157 = vsub.f32 %v155, %v156
    %159 = vset.pattern.permute.xlu0 0
    %160 = vperm.xlu0 %159, %v157
    %v161 = vpop.permute.xlu0 %160
    %v163 = vadd.f32 %v154, %v161
    %v164 = vmul.f32 %v163, 0.01
    %v165 = vmax.f32 %v163, %v164
    %166 = vrot.lane.b32.xlu0 %v165, 1
    %v167 = vpop.permute.xlu0 %166
    %v168 = vmul.f32 %v167, %v59
    %169 = vrot.lane.b32.xlu0 %v165, 127
    %v170 = vpop.permute.xlu0 %169
    %v171 = vmul.f32 %v170, %v68
    %v172 = vpack.c.bf16 %v165, %v168
    %v173 = vpack.c.bf16 %v171, %v171
    %v174 = vld [vmem:[%s8] sm:$0xf]
    %v175 = vld [vmem:[%s9] sm:$0xff]
    %177 = vset.pattern.permute.xlu0 0
    %178 = vperm.xlu0 %177, %v175
    %v179 = vpop.permute.xlu0 %178
    %v182 = vsel %vm80, %v174, 0
    %v185 = vsel %vm84, %v173, 0
    %187 = vmatprep.subr.bf16.mxu0 0
    %188 = vmatpush1.bf16.msra.mxu0 0
    %189 = vmatprep.subr.bf16.mxu0 0
    %190 = vmatpush1.bf16.msra.mxu0 0
    %191 = vmatprep.subr.bf16.mxu0 0
    %192 = vmatpush1.bf16.msra.mxu0 0
    %193 = vmatprep.subr.bf16.mxu0 0
    %194 = vmatpush1.bf16.msra.mxu0 0
    %195 = vmatprep.subr.bf16.mxu0 0
    %196 = vmatpush1.bf16.msra.mxu0 0
    %197 = vmatprep.subr.bf16.mxu0 0
    %198 = vmatpush1.bf16.msra.mxu0 0
    %199 = vmatprep.subr.bf16.mxu0 0
    %200 = vmatpush1.bf16.msra.mxu0 %v185
    %201 = vmatprep.subr.bf16.mxu0 0
    %202 = vmatpush1.bf16.msra.mxu0 %v172
    %203 = vmatprep.subr.bf16.mxu0 0
    %204 = vmatpush2.bf16.msra.mxu0 0
    %205 = vmatprep.subr.bf16.mxu0 0
    %206 = vmatpush2.bf16.msra.mxu0 0
    %207 = vmatprep.subr.bf16.mxu0 0
    %208 = vmatpush2.bf16.msra.mxu0 0
    %209 = vmatprep.subr.bf16.mxu0 0
    %210 = vmatpush2.bf16.msra.mxu0 0
    %211 = vmatprep.subr.bf16.mxu0 0
    %212 = vmatpush2.bf16.msra.mxu0 0
    %213 = vmatprep.subr.bf16.mxu0 0
    %214 = vmatpush2.bf16.msra.mxu0 0
    %215 = vmatprep.subr.bf16.mxu0 0
    %216 = vmatpush2.bf16.msra.mxu0 0
    %217 = vmatprep.subr.bf16.mxu0 0
    %218 = vmatpush2.bf16.msra.mxu0 0
    %219 = vmatprep.mubr.bf16.mxu0 0
    %220 = vmatmul.mubr.bf16.gmra.mxu0 %v182
    %v221 = vpop.f32.mrf.mxu0
    %v222 = vadd.f32 %v179, %v221
    %v223 = vpop.f32.mrf.mxu0
    %v224 = vpop.f32.mrf.mxu0
    %v225 = vpop.f32.mrf.mxu0
    %226 = vdwg.mxu0
    %v227 = vmul.f32 %v222, %v132
    %228 = vadd.xlane.f32.xlu0 %v227
    %v229 = vpop.xlane.xlu0 %228
    %v230 = vmul.f32 %v222, %v222
    %v231 = vmul.f32 %v230, %v132
    %232 = vadd.xlane.f32.xlu0 %v231
    %v233 = vpop.xlane.xlu0 %232
    %v234 = vmul.f32 %v229, 0.03125
    %v235 = vmul.f32 %v233, 0.03125
    %v236 = vmul.f32 %v234, %v234
    %v237 = vsub.f32 %v235, %v236
    %v238 = vld [vmem:[%s10] sm:$0xff]
    %v239 = vadd.f32 %v237, 1e-05
    %v240 = vrsqrt.pop %v239
    %v241 = vmul.f32 %v238, %v240
    %243 = vset.pattern.permute.xlu0 0
    %244 = vperm.xlu0 %243, %v241
    %v245 = vpop.permute.xlu0 %244
    %v247 = vmul.f32 %v222, %v245
    %v248 = vld [vmem:[%s11] sm:$0xff]
    %v249 = vmul.f32 %v234, %v241
    %v250 = vsub.f32 %v248, %v249
    %252 = vset.pattern.permute.xlu0 0
    %253 = vperm.xlu0 %252, %v250
    %v254 = vpop.permute.xlu0 %253
    %v256 = vadd.f32 %v247, %v254
    %v257 = vld [vmem:[%s12] sm:$0xf]
    %v258 = vpack.c.bf16 %v49, %v49
    %v259 = vld [vmem:[%s13] sm:$0xff]
    %261 = vset.pattern.permute.xlu0 0
    %262 = vperm.xlu0 %261, %v259
    %v263 = vpop.permute.xlu0 %262
    %vm265 = vcmask 64512
    %v267 = vsel %vm265, %v257, 0
    %v270 = vsel %vm84, %v258, 0
    %272 = vmatprep.subr.bf16.mxu0 0
    %273 = vmatpush1.bf16.msra.mxu0 0
    %274 = vmatprep.subr.bf16.mxu0 0
    %275 = vmatpush1.bf16.msra.mxu0 0
    %276 = vmatprep.subr.bf16.mxu0 0
    %277 = vmatpush1.bf16.msra.mxu0 0
    %278 = vmatprep.subr.bf16.mxu0 0
    %279 = vmatpush1.bf16.msra.mxu0 0
    %280 = vmatprep.subr.bf16.mxu0 0
    %281 = vmatpush1.bf16.msra.mxu0 0
    %282 = vmatprep.subr.bf16.mxu0 0
    %283 = vmatpush1.bf16.msra.mxu0 0
    %284 = vmatprep.subr.bf16.mxu0 0
    %285 = vmatpush1.bf16.msra.mxu0 0
    %286 = vmatprep.subr.bf16.mxu0 0
    %287 = vmatpush1.bf16.msra.mxu0 %v270
    %288 = vmatprep.subr.bf16.mxu0 0
    %289 = vmatpush2.bf16.msra.mxu0 0
    %290 = vmatprep.subr.bf16.mxu0 0
    %291 = vmatpush2.bf16.msra.mxu0 0
    %292 = vmatprep.subr.bf16.mxu0 0
    %293 = vmatpush2.bf16.msra.mxu0 0
    %294 = vmatprep.subr.bf16.mxu0 0
    %295 = vmatpush2.bf16.msra.mxu0 0
    %296 = vmatprep.subr.bf16.mxu0 0
    %297 = vmatpush2.bf16.msra.mxu0 0
    %298 = vmatprep.subr.bf16.mxu0 0
    %299 = vmatpush2.bf16.msra.mxu0 0
    %300 = vmatprep.subr.bf16.mxu0 0
    %301 = vmatpush2.bf16.msra.mxu0 0
    %302 = vmatprep.subr.bf16.mxu0 0
    %303 = vmatpush2.bf16.msra.mxu0 0
    %304 = vmatprep.mubr.bf16.mxu0 0
    %305 = vmatmul.mubr.bf16.gmra.mxu0 %v267
    %v306 = vpop.f32.mrf.mxu0
    %v307 = vadd.f32 %v263, %v306
    %v308 = vpop.f32.mrf.mxu0
    %v309 = vpop.f32.mrf.mxu0
    %v310 = vpop.f32.mrf.mxu0
    %311 = vdwg.mxu0
    %v312 = vadd.f32 %v307, %v256
    %v313 = vmul.f32 %v312, 0.01
    %v314 = vmax.f32 %v312, %v313
    %315 = vst [vmem:[#allocation2] sm:$0xff] %v314
    // Predicated region
    $region58: #{tpu_custom_call.1} parent=1 // pred_check
      _
    $region59: #{tpu_custom_call.1} parent=1 // pred_check_branch
      %317 = sbr.rel (0) target = $region61
    $region60: #{tpu_custom_call.1} parent=1 // pred_region
      %s319 = ssub.s32 128, 128
      %320 = vsyncadd [#allocation3], %s319
      %s322 = sshll.u32 [#allocation2], 4
      %s323 = int_to_ptr.vmem [resolvable:$true] %s322
      %325 = dma.vmem_to_hbm [thread:$0]  %s323, 128, %s14, [#allocation3]
    $region61: #{tpu_custom_call.1} parent=1 // pred_fallthru
      _
    // Predicated region
    $region62: #{tpu_custom_call.1} parent=1 // pred_check
      _
    $region63: #{tpu_custom_call.1} parent=1 // pred_check_branch
      %327 = sbr.rel (0) target = $region65
    $region64: #{tpu_custom_call.1} parent=1 // pred_region
      %328 = dma.done [#allocation3], 128
    $region65: #{tpu_custom_call.1} parent=1 // pred_fallthru
      _
    %329 = vsyncpa [#allocation3], 1

</llo_original>
